<compile_context>
chip_gen: v6e
topology: v6e:2x2x1
jax: 0.10.0
libtpu: 0.0.40
codegen_flags: <defaults>
</compile_context>

<pallas_src>
import jax
import jax.numpy as jnp
from jax.experimental import pallas as pl
from jax.experimental.pallas import tpu as pltpu

_LANE = 128
# Primitives handled per grid step.  Must be a multiple of 1024 so that
#   - the quaternion lane tile (PPT) is a multiple of 128, and
#   - the additive row tile (3*PPT/128) is a multiple of 8 (sublane rule)
# whenever more than one tile is used.
_PRIMS_PER_TILE_MAX = 16384


def _round_up(x, m):
    return (x + m - 1) // m * m


def _prim_union_kernel(shape_ref, dshape_ref, trans_ref, dtrans_ref, q12_ref,
                       shape_out_ref, trans_out_ref, quat_out_ref):
    # Elementwise adds on lane-dense [rows, 128] slabs (pure VPU, full vregs).
    shape_out_ref[...] = shape_ref[...] + dshape_ref[...]
    trans_out_ref[...] = trans_ref[...] + dtrans_ref[...]

    # Hamilton quaternion product, component-major.  q12_ref is [8, rows, 128]
    # with planes 0..3 = (w1, x1, y1, z1) and planes 4..7 = (w2, x2, y2, z2).
    # Each plane is a lane-dense [rows, 128] tile, so the product is just
    # 16 multiplies + 12 add/subs on the VPU with static leading-axis indexing
    # — no layout work, no masked stores.
    w1, x1, y1, z1 = q12_ref[0], q12_ref[1], q12_ref[2], q12_ref[3]
    w2, x2, y2, z2 = q12_ref[4], q12_ref[5], q12_ref[6], q12_ref[7]
    quat_out_ref[0] = w1 * w2 - x1 * x2 - y1 * y2 - z1 * z2
    quat_out_ref[1] = w1 * x2 + x1 * w2 + y1 * z2 - z1 * y2
    quat_out_ref[2] = w1 * y2 - x1 * z2 + y1 * w2 + z1 * x2
    quat_out_ref[3] = w1 * z2 + x1 * y2 - y1 * x2 + z1 * w2


def prim_union(shape, trans, quat, deltashape, deltatrans, deltaquat, looptime=1):
    """shape/trans/deltas: [B, P, 3]; quat/deltaquat: [B, P, 4] in (w,x,y,z) order.

    `looptime` is unused in the reference forward pass; kept for signature parity.
    """
    del looptime  # unused by the reference forward
    B, P, _ = quat.shape
    n = B * P                       # number of primitives
    m = n * 3                       # elements per shape/trans tensor

    ppt = min(_PRIMS_PER_TILE_MAX, _round_up(n, 1024))  # primitives per grid step
    nq = _round_up(n, ppt)          # padded primitive count
    rq = nq // _LANE                # quaternion slab rows
    trq = ppt // _LANE              # quaternion rows per tile
    ma = 3 * nq                     # padded additive-stream length
    ra = ma // _LANE                # additive slab rows
    rpt = 3 * ppt // _LANE          # additive rows per tile
    num_tiles = nq // ppt           # identical for both streams by construction

    def add_slab(x):
        flat = x.reshape(-1)
        if ma != m:
            flat = jnp.pad(flat, (0, ma - m))
        return flat.reshape(ra, _LANE)

    # Pack quat + deltaquat into one component-major slab [8, rq, 128].
    # (concat + pad + transpose is a single fused XLA relayout; the Pallas
    #  kernel itself never sees a transpose or a last-dim-of-4 layout.)
    q12 = jnp.concatenate([quat.reshape(n, 4), deltaquat.reshape(n, 4)], axis=1)
    if nq != n:
        q12 = jnp.pad(q12, ((0, nq - n), (0, 0)))
    q12_slab = q12.T.reshape(8, rq, _LANE)

    add_in_spec = pl.BlockSpec((rpt, _LANE), lambda i: (i, 0))
    add_out_spec = pl.BlockSpec((rpt, _LANE), lambda i: (i, 0))
    q_in_spec = pl.BlockSpec((8, trq, _LANE), lambda i: (0, i, 0))
    q_out_spec = pl.BlockSpec((4, trq, _LANE), lambda i: (0, i, 0))

    shape_out, trans_out, quat_out = pl.pallas_call(
        _prim_union_kernel,
        grid=(num_tiles,),
        in_specs=[add_in_spec, add_in_spec, add_in_spec, add_in_spec, q_in_spec],
        out_specs=(add_out_spec, add_out_spec, q_out_spec),
        out_shape=(
            jax.ShapeDtypeStruct((ra, _LANE), shape.dtype),
            jax.ShapeDtypeStruct((ra, _LANE), trans.dtype),
            jax.ShapeDtypeStruct((4, rq, _LANE), quat.dtype),
        ),
        compiler_params=pltpu.CompilerParams(
            dimension_semantics=("parallel",),
        ),
    )(add_slab(shape), add_slab(deltashape),
      add_slab(trans), add_slab(deltatrans),
      q12_slab)

    # Cosmetic reshapes back to the PyTorch-like layout.
    shape_rlt = shape_out.reshape(-1)[:m].reshape(B, P, 3)
    trans_rlt = trans_out.reshape(-1)[:m].reshape(B, P, 3)
    quat_rlt = quat_out.reshape(4, nq).T[:n].reshape(B, P, 4)
    return shape_rlt, trans_rlt, quat_rlt


def _quat_mult_ref(q, d):
    # Pure-JAX reference Hamilton product, (w, x, y, z) convention.
    w1, x1, y1, z1 = q[..., 0], q[..., 1], q[..., 2], q[..., 3]
    w2, x2, y2, z2 = d[..., 0], d[..., 1], d[..., 2], d[..., 3]
    return jnp.stack([
        w1 * w2 - x1 * x2 - y1 * y2 - z1 * z2,
        w1 * x2 + x1 * w2 + y1 * z2 - z1 * y2,
        w1 * y2 - x1 * z2 + y1 * w2 + z1 * x2,
        w1 * z2 + x1 * y2 - y1 * x2 + z1 * w2,
    ], axis=-1)


if __name__ == "__main__":
    B = 2   # batch
    P = 4   # config.primNum (number of primitives)
    # config.nSamplePoints (sp) is stored in __init__ but unused in forward.

    key = jax.random.PRNGKey(0)
    ks = jax.random.split(key, 6)
    shape = jax.random.normal(ks[0], (B, P, 3), dtype=jnp.float32)
    trans = jax.random.normal(ks[1], (B, P, 3), dtype=jnp.float32)
    quat = jax.random.normal(ks[2], (B, P, 4), dtype=jnp.float32)
    quat = quat / jnp.linalg.norm(quat, axis=-1, keepdims=True)
    deltashape = jax.random.normal(ks[3], (B, P, 3), dtype=jnp.float32)
    deltatrans = jax.random.normal(ks[4], (B, P, 3), dtype=jnp.float32)
    deltaquat = jax.random.normal(ks[5], (B, P, 4), dtype=jnp.float32)
    deltaquat = deltaquat / jnp.linalg.norm(deltaquat, axis=-1, keepdims=True)

    shape_rlt, trans_rlt, quat_rlt = prim_union(
        shape, trans, quat, deltashape, deltatrans, deltaquat)
    jax.block_until_ready((shape_rlt, trans_rlt, quat_rlt))

    # Correctness check against a pure-JAX reference.
    assert shape_rlt.shape == (B, P, 3)
    assert trans_rlt.shape == (B, P, 3)
    assert quat_rlt.shape == (B, P, 4)
    assert jnp.allclose(shape_rlt, shape + deltashape, atol=1e-6)
    assert jnp.allclose(trans_rlt, trans + deltatrans, atol=1e-6)
    assert jnp.allclose(quat_rlt, _quat_mult_ref(quat, deltaquat), atol=1e-5)

    print("KERNEL_OK")
</pallas_src>

<mosaic_0001>
module attributes {stable_mosaic.version = 11 : i64} {
  func.func @_prim_union_kernel(%arg0: i32, %arg1: memref<24x128xf32, #tpu.memory_space<vmem>>, %arg2: memref<24x128xf32, #tpu.memory_space<vmem>>, %arg3: memref<24x128xf32, #tpu.memory_space<vmem>>, %arg4: memref<24x128xf32, #tpu.memory_space<vmem>>, %arg5: memref<8x8x128xf32, #tpu.memory_space<vmem>>, %arg6: memref<24x128xf32, #tpu.memory_space<vmem>>, %arg7: memref<24x128xf32, #tpu.memory_space<vmem>>, %arg8: memref<4x8x128xf32, #tpu.memory_space<vmem>>) attributes {dimension_semantics = [#tpu.dimension_semantics<parallel>], iteration_bounds = array<i64: 1>, scalar_prefetch = 0 : i64, scratch_operands = 0 : i64, tpu.core_type = #tpu.core_type<tc>, window_params = [{transform_indices = @transform_0, window_bounds = array<i64: 24, 128>}, {transform_indices = @transform_1, window_bounds = array<i64: 24, 128>}, {transform_indices = @transform_2, window_bounds = array<i64: 24, 128>}, {transform_indices = @transform_3, window_bounds = array<i64: 24, 128>}, {transform_indices = @transform_4, window_bounds = array<i64: 8, 8, 128>}, {transform_indices = @transform_5, window_bounds = array<i64: 24, 128>}, {transform_indices = @transform_6, window_bounds = array<i64: 24, 128>}, {transform_indices = @transform_7, window_bounds = array<i64: 4, 8, 128>}]} {
    %c0 = arith.constant 0 : index
    %c0_0 = arith.constant 0 : index
    %0 = vector.load %arg1[%c0, %c0_0] : memref<24x128xf32, #tpu.memory_space<vmem>>, vector<24x128xf32>
    %c0_1 = arith.constant 0 : index
    %c0_2 = arith.constant 0 : index
    %1 = vector.load %arg2[%c0_1, %c0_2] : memref<24x128xf32, #tpu.memory_space<vmem>>, vector<24x128xf32>
    %2 = arith.addf %0, %1 : vector<24x128xf32>
    %c0_3 = arith.constant 0 : index
    %c0_4 = arith.constant 0 : index
    %3 = vector.load %arg6[%c0_3, %c0_4] : memref<24x128xf32, #tpu.memory_space<vmem>>, vector<24x128xf32>
    tpu.vector_store %arg6[%c0_3, %c0_4], %2 {strides = array<i32>} : memref<24x128xf32, #tpu.memory_space<vmem>>, vector<24x128xf32>,
    %c0_5 = arith.constant 0 : index
    %c0_6 = arith.constant 0 : index
    %4 = vector.load %arg3[%c0_5, %c0_6] : memref<24x128xf32, #tpu.memory_space<vmem>>, vector<24x128xf32>
    %c0_7 = arith.constant 0 : index
    %c0_8 = arith.constant 0 : index
    %5 = vector.load %arg4[%c0_7, %c0_8] : memref<24x128xf32, #tpu.memory_space<vmem>>, vector<24x128xf32>
    %6 = arith.addf %4, %5 : vector<24x128xf32>
    %c0_9 = arith.constant 0 : index
    %c0_10 = arith.constant 0 : index
    %7 = vector.load %arg7[%c0_9, %c0_10] : memref<24x128xf32, #tpu.memory_space<vmem>>, vector<24x128xf32>
    tpu.vector_store %arg7[%c0_9, %c0_10], %6 {strides = array<i32>} : memref<24x128xf32, #tpu.memory_space<vmem>>, vector<24x128xf32>,
    %c0_11 = arith.constant 0 : index
    %c0_12 = arith.constant 0 : index
    %c0_13 = arith.constant 0 : index
    %8 = vector.load %arg5[%c0_11, %c0_12, %c0_13] : memref<8x8x128xf32, #tpu.memory_space<vmem>>, vector<1x8x128xf32>
    %9 = vector.shape_cast %8 : vector<1x8x128xf32> to vector<8x128xf32>
    %c1 = arith.constant 1 : index
    %c0_14 = arith.constant 0 : index
    %c0_15 = arith.constant 0 : index
    %10 = vector.load %arg5[%c1, %c0_14, %c0_15] : memref<8x8x128xf32, #tpu.memory_space<vmem>>, vector<1x8x128xf32>
    %11 = vector.shape_cast %10 : vector<1x8x128xf32> to vector<8x128xf32>
    %c2 = arith.constant 2 : index
    %c0_16 = arith.constant 0 : index
    %c0_17 = arith.constant 0 : index
    %12 = vector.load %arg5[%c2, %c0_16, %c0_17] : memref<8x8x128xf32, #tpu.memory_space<vmem>>, vector<1x8x128xf32>
    %13 = vector.shape_cast %12 : vector<1x8x128xf32> to vector<8x128xf32>
    %c3 = arith.constant 3 : index
    %c0_18 = arith.constant 0 : index
    %c0_19 = arith.constant 0 : index
    %14 = vector.load %arg5[%c3, %c0_18, %c0_19] : memref<8x8x128xf32, #tpu.memory_space<vmem>>, vector<1x8x128xf32>
    %15 = vector.shape_cast %14 : vector<1x8x128xf32> to vector<8x128xf32>
    %c4 = arith.constant 4 : index
    %c0_20 = arith.constant 0 : index
    %c0_21 = arith.constant 0 : index
    %16 = vector.load %arg5[%c4, %c0_20, %c0_21] : memref<8x8x128xf32, #tpu.memory_space<vmem>>, vector<1x8x128xf32>
    %17 = vector.shape_cast %16 : vector<1x8x128xf32> to vector<8x128xf32>
    %c5 = arith.constant 5 : index
    %c0_22 = arith.constant 0 : index
    %c0_23 = arith.constant 0 : index
    %18 = vector.load %arg5[%c5, %c0_22, %c0_23] : memref<8x8x128xf32, #tpu.memory_space<vmem>>, vector<1x8x128xf32>
    %19 = vector.shape_cast %18 : vector<1x8x128xf32> to vector<8x128xf32>
    %c6 = arith.constant 6 : index
    %c0_24 = arith.constant 0 : index
    %c0_25 = arith.constant 0 : index
    %20 = vector.load %arg5[%c6, %c0_24, %c0_25] : memref<8x8x128xf32, #tpu.memory_space<vmem>>, vector<1x8x128xf32>
    %21 = vector.shape_cast %20 : vector<1x8x128xf32> to vector<8x128xf32>
    %c7 = arith.constant 7 : index
    %c0_26 = arith.constant 0 : index
    %c0_27 = arith.constant 0 : index
    %22 = vector.load %arg5[%c7, %c0_26, %c0_27] : memref<8x8x128xf32, #tpu.memory_space<vmem>>, vector<1x8x128xf32>
    %23 = vector.shape_cast %22 : vector<1x8x128xf32> to vector<8x128xf32>
    %24 = arith.mulf %9, %17 : vector<8x128xf32>
    %25 = arith.mulf %11, %19 : vector<8x128xf32>
    %26 = arith.subf %24, %25 : vector<8x128xf32>
    %27 = arith.mulf %13, %21 : vector<8x128xf32>
    %28 = arith.subf %26, %27 : vector<8x128xf32>
    %29 = arith.mulf %15, %23 : vector<8x128xf32>
    %30 = arith.subf %28, %29 : vector<8x128xf32>
    %c0_28 = arith.constant 0 : index
    %c0_29 = arith.constant 0 : index
    %c0_30 = arith.constant 0 : index
    %31 = vector.load %arg8[%c0_28, %c0_29, %c0_30] : memref<4x8x128xf32, #tpu.memory_space<vmem>>, vector<1x8x128xf32>
    %32 = vector.shape_cast %31 : vector<1x8x128xf32> to vector<8x128xf32>
    %33 = vector.shape_cast %30 : vector<8x128xf32> to vector<1x8x128xf32>
    tpu.vector_store %arg8[%c0_28, %c0_29, %c0_30], %33 {strides = array<i32>} : memref<4x8x128xf32, #tpu.memory_space<vmem>>, vector<1x8x128xf32>,
    %34 = arith.mulf %9, %19 : vector<8x128xf32>
    %35 = arith.mulf %11, %17 : vector<8x128xf32>
    %36 = arith.addf %34, %35 : vector<8x128xf32>
    %37 = arith.mulf %13, %23 : vector<8x128xf32>
    %38 = arith.addf %36, %37 : vector<8x128xf32>
    %39 = arith.mulf %15, %21 : vector<8x128xf32>
    %40 = arith.subf %38, %39 : vector<8x128xf32>
    %c1_31 = arith.constant 1 : index
    %c0_32 = arith.constant 0 : index
    %c0_33 = arith.constant 0 : index
    %41 = vector.load %arg8[%c1_31, %c0_32, %c0_33] : memref<4x8x128xf32, #tpu.memory_space<vmem>>, vector<1x8x128xf32>
    %42 = vector.shape_cast %41 : vector<1x8x128xf32> to vector<8x128xf32>
    %43 = vector.shape_cast %40 : vector<8x128xf32> to vector<1x8x128xf32>
    tpu.vector_store %arg8[%c1_31, %c0_32, %c0_33], %43 {strides = array<i32>} : memref<4x8x128xf32, #tpu.memory_space<vmem>>, vector<1x8x128xf32>,
    %44 = arith.mulf %9, %21 : vector<8x128xf32>
    %45 = arith.mulf %11, %23 : vector<8x128xf32>
    %46 = arith.subf %44, %45 : vector<8x128xf32>
    %47 = arith.mulf %13, %17 : vector<8x128xf32>
    %48 = arith.addf %46, %47 : vector<8x128xf32>
    %49 = arith.mulf %15, %19 : vector<8x128xf32>
    %50 = arith.addf %48, %49 : vector<8x128xf32>
    %c2_34 = arith.constant 2 : index
    %c0_35 = arith.constant 0 : index
    %c0_36 = arith.constant 0 : index
    %51 = vector.load %arg8[%c2_34, %c0_35, %c0_36] : memref<4x8x128xf32, #tpu.memory_space<vmem>>, vector<1x8x128xf32>
    %52 = vector.shape_cast %51 : vector<1x8x128xf32> to vector<8x128xf32>
    %53 = vector.shape_cast %50 : vector<8x128xf32> to vector<1x8x128xf32>
    tpu.vector_store %arg8[%c2_34, %c0_35, %c0_36], %53 {strides = array<i32>} : memref<4x8x128xf32, #tpu.memory_space<vmem>>, vector<1x8x128xf32>,
    %54 = arith.mulf %9, %23 : vector<8x128xf32>
    %55 = arith.mulf %11, %21 : vector<8x128xf32>
    %56 = arith.addf %54, %55 : vector<8x128xf32>
    %57 = arith.mulf %13, %19 : vector<8x128xf32>
    %58 = arith.subf %56, %57 : vector<8x128xf32>
    %59 = arith.mulf %15, %17 : vector<8x128xf32>
    %60 = arith.addf %58, %59 : vector<8x128xf32>
    %c3_37 = arith.constant 3 : index
    %c0_38 = arith.constant 0 : index
    %c0_39 = arith.constant 0 : index
    %61 = vector.load %arg8[%c3_37, %c0_38, %c0_39] : memref<4x8x128xf32, #tpu.memory_space<vmem>>, vector<1x8x128xf32>
    %62 = vector.shape_cast %61 : vector<1x8x128xf32> to vector<8x128xf32>
    %63 = vector.shape_cast %60 : vector<8x128xf32> to vector<1x8x128xf32>
    tpu.vector_store %arg8[%c3_37, %c0_38, %c0_39], %63 {strides = array<i32>} : memref<4x8x128xf32, #tpu.memory_space<vmem>>, vector<1x8x128xf32>,
    return
  }
  func.func @transform_0(%arg0: i32) -> (i32, i32) {
    %c0_i32 = arith.constant 0 : i32
    %c0_i32_0 = arith.constant 0 : i32
    return %arg0, %c0_i32 : i32, i32
  }
  func.func @transform_1(%arg0: i32) -> (i32, i32) {
    %c0_i32 = arith.constant 0 : i32
    %c0_i32_0 = arith.constant 0 : i32
    return %arg0, %c0_i32 : i32, i32
  }
  func.func @transform_2(%arg0: i32) -> (i32, i32) {
    %c0_i32 = arith.constant 0 : i32
    %c0_i32_0 = arith.constant 0 : i32
    return %arg0, %c0_i32 : i32, i32
  }
  func.func @transform_3(%arg0: i32) -> (i32, i32) {
    %c0_i32 = arith.constant 0 : i32
    %c0_i32_0 = arith.constant 0 : i32
    return %arg0, %c0_i32 : i32, i32
  }
  func.func @transform_4(%arg0: i32) -> (i32, i32, i32) {
    %c0_i32 = arith.constant 0 : i32
    %c0_i32_0 = arith.constant 0 : i32
    %c0_i32_1 = arith.constant 0 : i32
    return %c0_i32, %arg0, %c0_i32_0 : i32, i32, i32
  }
  func.func @transform_5(%arg0: i32) -> (i32, i32) {
    %c0_i32 = arith.constant 0 : i32
    %c0_i32_0 = arith.constant 0 : i32
    return %arg0, %c0_i32 : i32, i32
  }
  func.func @transform_6(%arg0: i32) -> (i32, i32) {
    %c0_i32 = arith.constant 0 : i32
    %c0_i32_0 = arith.constant 0 : i32
    return %arg0, %c0_i32 : i32, i32
  }
  func.func @transform_7(%arg0: i32) -> (i32, i32, i32) {
    %c0_i32 = arith.constant 0 : i32
    %c0_i32_0 = arith.constant 0 : i32
    %c0_i32_1 = arith.constant 0 : i32
    return %c0_i32, %arg0, %c0_i32_0 : i32, i32, i32
  }
}

</mosaic_0001>

<llo_original>
// kernel: tpu_custom_call.1
$region0: #{tpu_custom_call.1}
  #allocation0 [shape = 'u32[]', space=smem, size = 0x4, offset = 0x4, fixed_abs, tag = 'smem constant byte address 0x4 - core index']
  #allocation1 [shape = 'u32[144,128]{1,0:T(1,128)}', space=vmem, size = 0x12000, scoped, tag = 'internal scratch']
  %s0 = inlined_call_operand.hbm [shape: f32[24,128], index: 0, kind: input, shape index: {}]
  %s1 = inlined_call_operand.hbm [shape: f32[24,128], index: 1, kind: input, shape index: {}]
  %s2 = inlined_call_operand.hbm [shape: f32[24,128], index: 2, kind: input, shape index: {}]
  %s3 = inlined_call_operand.hbm [shape: f32[24,128], index: 3, kind: input, shape index: {}]
  %s4 = inlined_call_operand.hbm [shape: f32[8,8,128], index: 4, kind: input, shape index: {}]
  %s5 = inlined_call_operand.hbm [shape: f32[24,128], index: 5, kind: output, shape index: {0}]
  %s6 = inlined_call_operand.hbm [shape: f32[24,128], index: 6, kind: output, shape index: {1}]
  %s7 = inlined_call_operand.hbm [shape: f32[4,8,128], index: 7, kind: output, shape index: {2}]
  %8 = xla_tuple %s5, %s6, %s7
  %s9 = sld [smem:[#allocation0]]
  $region66: #{tpu_custom_call.1} parent=0
    _
  %s11 = ssub.s32 1, %s9
  %s12 = scalar_select 0, %s11, %s9
  $region1: #{tpu_custom_call.1} parent=0
    #allocation2 [shape = 'u8[12288]{0}', space=vmem, size = 0x3000, scoped, tag = 'input window, operand 0, single buffered']
    #allocation3 [shape = 's32[1]{0}', space=sflag, size = 0x4, scoped, tag = 'scoped memory for tpu_custom_call.1']
    #allocation4 [shape = 's32[1]{0}', space=sflag, size = 0x4, scoped, tag = 'scoped memory for tpu_custom_call.1']
    #allocation5 [shape = 'u8[12288]{0}', space=vmem, size = 0x3000, scoped, tag = 'input window, operand 1, single buffered']
    #allocation6 [shape = 's32[1]{0}', space=sflag, size = 0x4, scoped, tag = 'scoped memory for tpu_custom_call.1']
    #allocation7 [shape = 'u8[12288]{0}', space=vmem, size = 0x3000, scoped, tag = 'input window, operand 2, single buffered']
    #allocation8 [shape = 'u8[12288]{0}', space=vmem, size = 0x3000, scoped, tag = 'input window, operand 3, single buffered']
    #allocation9 [shape = 's32[1]{0}', space=sflag, size = 0x4, scoped, tag = 'scoped memory for tpu_custom_call.1']
    #allocation10 [shape = 'u8[32768]{0}', space=vmem, size = 0x8000, scoped, tag = 'input window, operand 4, single buffered']
    #allocation11 [shape = 'u8[12288]{0}', space=vmem, size = 0x3000, scoped, tag = 'output window, operand 0, single buffered']
    #allocation12 [shape = 'u8[12288]{0}', space=vmem, size = 0x3000, scoped, tag = 'output window, operand 1, single buffered']
    #allocation13 [shape = 's32[1]{0}', space=sflag, size = 0x4, scoped, tag = 'scoped memory for tpu_custom_call.1']
    #allocation14 [shape = 'u8[16384]{0}', space=vmem, size = 0x4000, scoped, tag = 'output window, operand 2, single buffered']
    %13 = vsyncpa [#allocation3], 0
    %14 = vsyncpa [#allocation6], 0
    %15 = vsyncpa [#allocation9], 0
    %16 = vsyncpa [#allocation4], 0
    %17 = vsyncpa [#allocation13], 0
    // Predicated region
    $region2: #{tpu_custom_call.1} parent=1 // pred_check
      _
    $region3: #{tpu_custom_call.1} parent=1 // pred_check_branch
      %19 = sbr.rel (0) target = $region5
    $region4: #{tpu_custom_call.1} parent=1 // pred_region
      %s21 = ssub.s32 384, 384
      %22 = vsyncadd [#allocation3], %s21
      %s23 = sshll.u32 [#allocation2], 4
      %s24 = int_to_ptr.vmem [resolvable:$true] %s23
      %29 = dma.hbm_to_vmem [thread:$0]  %s0, 384, %s24, [#allocation3], 128, 128, 8
    $region5: #{tpu_custom_call.1} parent=1 // pred_fallthru
      _
    // Predicated region
    $region6: #{tpu_custom_call.1} parent=1 // pred_check
      _
    $region7: #{tpu_custom_call.1} parent=1 // pred_check_branch
      %31 = sbr.rel (0) target = $region9
    $region8: #{tpu_custom_call.1} parent=1 // pred_region
      %s33 = ssub.s32 384, 384
      %34 = vsyncadd [#allocation6], %s33
      %s35 = sshll.u32 [#allocation5], 4
      %s36 = int_to_ptr.vmem [resolvable:$true] %s35
      %41 = dma.hbm_to_vmem [thread:$0]  %s1, 384, %s36, [#allocation6], 128, 128, 8
    $region9: #{tpu_custom_call.1} parent=1 // pred_fallthru
      _
    // Predicated region
    $region10: #{tpu_custom_call.1} parent=1 // pred_check
      _
    $region11: #{tpu_custom_call.1} parent=1 // pred_check_branch
      %43 = sbr.rel (0) target = $region13
    $region12: #{tpu_custom_call.1} parent=1 // pred_region
      %s45 = ssub.s32 384, 384
      %46 = vsyncadd [#allocation6], %s45
      %s47 = sshll.u32 [#allocation7], 4
      %s48 = int_to_ptr.vmem [resolvable:$true] %s47
      %53 = dma.hbm_to_vmem [thread:$0]  %s2, 384, %s48, [#allocation6], 128, 128, 8
    $region13: #{tpu_custom_call.1} parent=1 // pred_fallthru
      _
    // Predicated region
    $region14: #{tpu_custom_call.1} parent=1 // pred_check
      _
    $region15: #{tpu_custom_call.1} parent=1 // pred_check_branch
      %55 = sbr.rel (0) target = $region17
    $region16: #{tpu_custom_call.1} parent=1 // pred_region
      %s57 = ssub.s32 384, 384
      %58 = vsyncadd [#allocation9], %s57
      %s59 = sshll.u32 [#allocation8], 4
      %s60 = int_to_ptr.vmem [resolvable:$true] %s59
      %65 = dma.hbm_to_vmem [thread:$0]  %s3, 384, %s60, [#allocation9], 128, 128, 8
    $region17: #{tpu_custom_call.1} parent=1 // pred_fallthru
      _
    // Predicated region
    $region18: #{tpu_custom_call.1} parent=1 // pred_check
      _
    $region19: #{tpu_custom_call.1} parent=1 // pred_check_branch
      %67 = sbr.rel (0) target = $region21
    $region20: #{tpu_custom_call.1} parent=1 // pred_region
      %s69 = ssub.s32 1024, 1024
      %70 = vsyncadd [#allocation9], %s69
      %s71 = sshll.u32 [#allocation10], 4
      %s72 = int_to_ptr.vmem [resolvable:$true] %s71
      %77 = dma.hbm_to_vmem [thread:$0]  %s4, 1024, %s72, [#allocation9], 128, 128, 8
    $region21: #{tpu_custom_call.1} parent=1 // pred_fallthru
      _
    // Predicated region
    $region22: #{tpu_custom_call.1} parent=1 // pred_check
      _
    $region23: #{tpu_custom_call.1} parent=1 // pred_check_branch
      %79 = sbr.rel (0) target = $region25
    $region24: #{tpu_custom_call.1} parent=1 // pred_region
      %80 = dma.done [#allocation3], 384
    $region25: #{tpu_custom_call.1} parent=1 // pred_fallthru
      _
    // Predicated region
    $region26: #{tpu_custom_call.1} parent=1 // pred_check
      _
    $region27: #{tpu_custom_call.1} parent=1 // pred_check_branch
      %82 = sbr.rel (0) target = $region29
    $region28: #{tpu_custom_call.1} parent=1 // pred_region
      %83 = dma.done [#allocation6], 384
    $region29: #{tpu_custom_call.1} parent=1 // pred_fallthru
      _
    // Predicated region
    $region30: #{tpu_custom_call.1} parent=1 // pred_check
      _
    $region31: #{tpu_custom_call.1} parent=1 // pred_check_branch
      %85 = sbr.rel (0) target = $region33
    $region32: #{tpu_custom_call.1} parent=1 // pred_region
      %86 = dma.done [#allocation6], 384
    $region33: #{tpu_custom_call.1} parent=1 // pred_fallthru
      _
    // Predicated region
    $region34: #{tpu_custom_call.1} parent=1 // pred_check
      _
    $region35: #{tpu_custom_call.1} parent=1 // pred_check_branch
      %88 = sbr.rel (0) target = $region37
    $region36: #{tpu_custom_call.1} parent=1 // pred_region
      %89 = dma.done [#allocation9], 384
    $region37: #{tpu_custom_call.1} parent=1 // pred_fallthru
      _
    // Predicated region
    $region38: #{tpu_custom_call.1} parent=1 // pred_check
      _
    $region39: #{tpu_custom_call.1} parent=1 // pred_check_branch
      %91 = sbr.rel (0) target = $region41
    $region40: #{tpu_custom_call.1} parent=1 // pred_region
      %92 = dma.done [#allocation9], 1024
    $region41: #{tpu_custom_call.1} parent=1 // pred_fallthru
      _
    %v93 = vld [vmem:[#allocation2] sm:$0xff]
    %v94 = vld [vmem:[#allocation2 + $0x8] sm:$0xff]
    %v95 = vld [vmem:[#allocation2 + $0x10] sm:$0xff]
    %v96 = vld [vmem:[#allocation5] sm:$0xff]
    %v97 = vld [vmem:[#allocation5 + $0x8] sm:$0xff]
    %v98 = vld [vmem:[#allocation5 + $0x10] sm:$0xff]
    %v99 = vadd.f32 %v93, %v96
    %v100 = vadd.f32 %v94, %v97
    %v101 = vadd.f32 %v95, %v98
    %102 = vst [vmem:[#allocation11] sm:$0xff] %v99
    %103 = vst [vmem:[#allocation11 + $0x8] sm:$0xff] %v100
    %104 = vst [vmem:[#allocation11 + $0x10] sm:$0xff] %v101
    %v105 = vld [vmem:[#allocation7] sm:$0xff]
    %v106 = vld [vmem:[#allocation7 + $0x8] sm:$0xff]
    %v107 = vld [vmem:[#allocation7 + $0x10] sm:$0xff]
    %v108 = vld [vmem:[#allocation8] sm:$0xff]
    %v109 = vld [vmem:[#allocation8 + $0x8] sm:$0xff]
    %v110 = vld [vmem:[#allocation8 + $0x10] sm:$0xff]
    %v111 = vadd.f32 %v105, %v108
    %v112 = vadd.f32 %v106, %v109
    %v113 = vadd.f32 %v107, %v110
    %114 = vst [vmem:[#allocation12] sm:$0xff] %v111
    %115 = vst [vmem:[#allocation12 + $0x8] sm:$0xff] %v112
    %116 = vst [vmem:[#allocation12 + $0x10] sm:$0xff] %v113
    %v117 = vld [vmem:[#allocation10] sm:$0xff]
    %s118 = scalar_lea.vmem [#allocation10], 8
    %v119 = vld [vmem:[%s118] sm:$0xff]
    %s120 = scalar_lea.vmem [#allocation10], 16
    %v121 = vld [vmem:[%s120] sm:$0xff]
    %s122 = scalar_lea.vmem [#allocation10], 24
    %v123 = vld [vmem:[%s122] sm:$0xff]
    %s124 = scalar_lea.vmem [#allocation10], 32
    %v125 = vld [vmem:[%s124] sm:$0xff]
    %s126 = scalar_lea.vmem [#allocation10], 40
    %v127 = vld [vmem:[%s126] sm:$0xff]
    %s128 = scalar_lea.vmem [#allocation10], 48
    %v129 = vld [vmem:[%s128] sm:$0xff]
    %s130 = scalar_lea.vmem [#allocation10], 56
    %v131 = vld [vmem:[%s130] sm:$0xff]
    %v132 = vmul.f32 %v117, %v125
    %v133 = vmul.f32 %v119, %v127
    %v134 = vsub.f32 %v132, %v133
    %v135 = vmul.f32 %v121, %v129
    %v136 = vsub.f32 %v134, %v135
    %v137 = vmul.f32 %v123, %v131
    %v138 = vsub.f32 %v136, %v137
    %139 = vst [vmem:[#allocation14] sm:$0xff] %v138
    %v140 = vmul.f32 %v117, %v127
    %v141 = vmul.f32 %v119, %v125
    %v142 = vadd.f32 %v140, %v141
    %v143 = vmul.f32 %v121, %v131
    %v144 = vadd.f32 %v142, %v143
    %v145 = vmul.f32 %v123, %v129
    %v146 = vsub.f32 %v144, %v145
    %s147 = scalar_lea.vmem [#allocation14], 8
    %148 = vst [vmem:[%s147] sm:$0xff] %v146
    %v149 = vmul.f32 %v117, %v129
    %v150 = vmul.f32 %v119, %v131
    %v151 = vsub.f32 %v149, %v150
    %v152 = vmul.f32 %v121, %v125
    %v153 = vadd.f32 %v151, %v152
    %v154 = vmul.f32 %v123, %v127
    %v155 = vadd.f32 %v153, %v154
    %s156 = scalar_lea.vmem [#allocation14], 16
    %157 = vst [vmem:[%s156] sm:$0xff] %v155
    %v158 = vmul.f32 %v117, %v131
    %v159 = vmul.f32 %v119, %v129
    %v160 = vadd.f32 %v158, %v159
    %v161 = vmul.f32 %v121, %v127
    %v162 = vsub.f32 %v160, %v161
    %v163 = vmul.f32 %v123, %v125
    %v164 = vadd.f32 %v162, %v163
    %s165 = scalar_lea.vmem [#allocation14], 24
    %166 = vst [vmem:[%s165] sm:$0xff] %v164
    // Predicated region
    $region42: #{tpu_custom_call.1} parent=1 // pred_check
      _
    $region43: #{tpu_custom_call.1} parent=1 // pred_check_branch
      %168 = sbr.rel (0) target = $region45
    $region44: #{tpu_custom_call.1} parent=1 // pred_region
      %s170 = ssub.s32 384, 384
      %171 = vsyncadd [#allocation4], %s170
      %s172 = sshll.u32 [#allocation11], 4
      %s173 = int_to_ptr.vmem [resolvable:$true] %s172
      %178 = dma.vmem_to_hbm [thread:$0]  %s173, 384, %s5, [#allocation4], 128, 128, 8
    $region45: #{tpu_custom_call.1} parent=1 // pred_fallthru
      _
    // Predicated region
    $region46: #{tpu_custom_call.1} parent=1 // pred_check
      _
    $region47: #{tpu_custom_call.1} parent=1 // pred_check_branch
      %180 = sbr.rel (0) target = $region49
    $region48: #{tpu_custom_call.1} parent=1 // pred_region
      %s182 = ssub.s32 384, 384
      %183 = vsyncadd [#allocation13], %s182
      %s184 = sshll.u32 [#allocation12], 4
      %s185 = int_to_ptr.vmem [resolvable:$true] %s184
      %190 = dma.vmem_to_hbm [thread:$0]  %s185, 384, %s6, [#allocation13], 128, 128, 8
    $region49: #{tpu_custom_call.1} parent=1 // pred_fallthru
      _
    // Predicated region
    $region50: #{tpu_custom_call.1} parent=1 // pred_check
      _
    $region51: #{tpu_custom_call.1} parent=1 // pred_check_branch
      %192 = sbr.rel (0) target = $region53
    $region52: #{tpu_custom_call.1} parent=1 // pred_region
      %s194 = ssub.s32 512, 512
      %195 = vsyncadd [#allocation13], %s194
      %s196 = sshll.u32 [#allocation14], 4
      %s197 = int_to_ptr.vmem [resolvable:$true] %s196
      %202 = dma.vmem_to_hbm [thread:$0]  %s197, 512, %s7, [#allocation13], 128, 128, 8
    $region53: #{tpu_custom_call.1} parent=1 // pred_fallthru
      _
    // Predicated region
    $region54: #{tpu_custom_call.1} parent=1 // pred_check
      _
    $region55: #{tpu_custom_call.1} parent=1 // pred_check_branch
      %204 = sbr.rel (0) target = $region57
    $region56: #{tpu_custom_call.1} parent=1 // pred_region
      %205 = dma.done [#allocation4], 384
    $region57: #{tpu_custom_call.1} parent=1 // pred_fallthru
      _
    // Predicated region
    $region58: #{tpu_custom_call.1} parent=1 // pred_check
      _
    $region59: #{tpu_custom_call.1} parent=1 // pred_check_branch
      %207 = sbr.rel (0) target = $region61
    $region60: #{tpu_custom_call.1} parent=1 // pred_region
      %208 = dma.done [#allocation13], 384
    $region61: #{tpu_custom_call.1} parent=1 // pred_fallthru
      _
    // Predicated region
    $region62: #{tpu_custom_call.1} parent=1 // pred_check
      _
    $region63: #{tpu_custom_call.1} parent=1 // pred_check_branch
      %210 = sbr.rel (0) target = $region65
    $region64: #{tpu_custom_call.1} parent=1 // pred_region
      %211 = dma.done [#allocation13], 512
    $region65: #{tpu_custom_call.1} parent=1 // pred_fallthru
      _
    %212 = vsyncpa [#allocation3], 1
    %213 = vsyncpa [#allocation6], 1
    %214 = vsyncpa [#allocation9], 1
    %215 = vsyncpa [#allocation4], 1
    %216 = vsyncpa [#allocation13], 1

</llo_original>
